<compile_context>
chip_gen: v5e
topology: v5e:2x2
jax: 0.10.0
libtpu: 0.0.40
codegen_flags: <defaults>
</compile_context>

<pallas_src>
import functools

import jax
import jax.numpy as jnp
from jax.experimental import pallas as pl
from jax.experimental.pallas import tpu as pltpu


# ----------------------------------------------------------------------------
# Fused classification losses kernel (lane-dense query layout)
# ----------------------------------------------------------------------------
def _focal_sum_over_lanes(x, tgt, bias, w, alpha):
    """x: [b, n, tq] f32 logits (classes on sublanes, queries on lanes),
    tgt: [b, 1, tq] int32 class ids, bias/w: [n, 1] per-class constants.
    Returns the focal loss summed over the query (lane) axis: [b, n, 1]."""
    # Invalid-class masking.  bias is 0 or -1e11; adding -1e11 to any normal
    # magnitude logit rounds to exactly -1e11 in f32, so this is equivalent to
    # the reference's `logits[:, :, invalid] = -1e11` (and the loss at those
    # entries is exactly 0 either way).
    x = x + bias

    # In-kernel one-hot: single class iota on the sublane axis.  The torch
    # reference scatters into n+1 columns and drops the last; targets are
    # always < n so this compare is identical -- no [B,Q,C] one-hot hits HBM.
    cls_iota = jax.lax.broadcasted_iota(jnp.int32, x.shape, 1)
    t = (cls_iota == tgt).astype(jnp.float32)

    # Stable sigmoid + BCE share a single exp; exact reciprocal for parity
    # with torch.sigmoid.
    e = jnp.exp(-jnp.abs(x))
    r = 1.0 / (1.0 + e)
    prob = jnp.where(x >= 0.0, r, e * r)

    # binary_cross_entropy_with_logits(weight=W): W*(max(x,0) - x*t + log(1+exp(-|x|)))
    ce = (jnp.maximum(x, 0.0) - x * t + jnp.log(1.0 + e)) * w
    p_t = prob * t + (1.0 - prob) * (1.0 - t)
    loss = ce * jnp.square(1.0 - p_t)                       # gamma == 2
    if alpha >= 0:
        loss = (alpha * t + (1.0 - alpha) * (1.0 - t)) * loss
    return jnp.sum(loss, axis=2, keepdims=True)             # [b, n, 1]


def _fused_cls_kernel(cls_ref, sup_ref, tcls_ref, tsup_ref,
                      cbias_ref, cw_ref, clast_ref, sbias_ref, sw_ref,
                      cls_out, sup_out, card_out, *, alpha):
    qi = pl.program_id(1)

    @pl.when(qi == 0)
    def _init():
        cls_out[...] = jnp.zeros_like(cls_out)
        sup_out[...] = jnp.zeros_like(sup_out)
        card_out[...] = jnp.zeros_like(card_out)

    x_cls = cls_ref[...].astype(jnp.float32)                # [b, C, tq]
    x_sup = sup_ref[...].astype(jnp.float32)                # [b, S, tq]
    t_cls = tcls_ref[...]                                   # [b, 1, tq] int32
    t_sup = tsup_ref[...]                                   # [b, 1, tq] int32

    # ---- cardinality on the raw (unmasked) class logits, as in the torch
    # reference: first-occurrence argmax != C-1  <=>  max(others) >= last. ----
    C = x_cls.shape[1]
    last = cls_ref[:, C - 1:C, :].astype(jnp.float32)       # [b, 1, tq]
    is_last = clast_ref[...] > 0.0                          # [C, 1]
    others = jnp.max(jnp.where(is_last, jnp.float32(-jnp.inf), x_cls),
                     axis=1, keepdims=True)                 # [b, 1, tq]
    card_out[...] += jnp.sum((others >= last).astype(jnp.float32),
                             axis=2, keepdims=True)         # [b, 1, 1]

    # ---- focal losses, summed over the query (lane) axis ----
    cls_out[...] += _focal_sum_over_lanes(x_cls, t_cls, cbias_ref[...],
                                          cw_ref[...], alpha)
    sup_out[...] += _focal_sum_over_lanes(x_sup, t_sup, sbias_ref[...],
                                          sw_ref[...], alpha)


def _per_class_vectors(n, invalid_idx, empty_weight):
    """bias (0 / -1e11), BCE weight (1 / empty_weight at last), last-class flag."""
    bias = jnp.zeros((n, 1), jnp.float32)
    if len(invalid_idx):
        bias = bias.at[jnp.asarray(list(invalid_idx), jnp.int32), 0].set(-1e11)
    w = jnp.ones((n, 1), jnp.float32).at[n - 1, 0].set(jnp.float32(empty_weight))
    last = jnp.zeros((n, 1), jnp.float32).at[n - 1, 0].set(1.0)
    return bias, w, last


def _num_megacore_splits(batch):
    """2 on dual-TensorCore chips (v7x) when it divides the batch, else 1."""
    try:
        kind = jax.devices()[0].device_kind.lower()
    except Exception:
        return 1
    two_tc = ("v7" in kind) or ("7x" in kind)
    return 2 if (two_tc and batch >= 2 and batch % 2 == 0) else 1


def _pick_query_tile(B, Q, C, S, budget_bytes=8 << 20):
    """Largest query tile whose double-buffered input blocks fit the budget."""
    per_q = 2 * B * (C + S + 2) * 4          # f32 logits + int32 targets, x2 buffers
    if Q * per_q <= budget_bytes:
        return Q                              # single grid step (overhead-bound regime)
    cap = max(128, int(budget_bytes // per_q))
    best = None
    for tq in range(128, min(cap, Q) + 1, 128):   # prefer 128-lane multiples
        if Q % tq == 0:
            best = tq
    if best is not None:
        return best
    for tq in range(min(cap, Q), 0, -1):
        if Q % tq == 0:
            return tq
    return Q


def fused_cls_losses_pallas(cls_logits, sup_logits, target_classes, target_super, *,
                            invalid_cls, invalid_sup, alpha, empty_weight):
    """Returns (focal_cls [B,C] summed over Q, focal_sup [B,S] summed over Q,
    card_pred [B] count of non-empty predictions)."""
    B, Q, C = cls_logits.shape
    S = sup_logits.shape[-1]

    # Lane-dense layout: queries on the 128-lane axis, classes on sublanes.
    cls_t = jnp.transpose(cls_logits, (0, 2, 1))            # [B, C, Q]
    sup_t = jnp.transpose(sup_logits, (0, 2, 1))            # [B, S, Q]
    tcls = target_classes.reshape(B, 1, Q).astype(jnp.int32)
    tsup = target_super.reshape(B, 1, Q).astype(jnp.int32)

    cbias, cw, clast = _per_class_vectors(C, invalid_cls, empty_weight)
    sbias, sw, _ = _per_class_vectors(S, invalid_sup, empty_weight)

    nb = _num_megacore_splits(B)
    bb = B // nb
    tq = _pick_query_tile(B, Q, C, S)
    nq = Q // tq

    kernel = functools.partial(_fused_cls_kernel, alpha=alpha)
    const_map = lambda b, q: (0, 0)

    focal_cls, focal_sup, card = pl.pallas_call(
        kernel,
        out_shape=(jax.ShapeDtypeStruct((B, C, 1), jnp.float32),
                   jax.ShapeDtypeStruct((B, S, 1), jnp.float32),
                   jax.ShapeDtypeStruct((B, 1, 1), jnp.float32)),
        grid_spec=pltpu.PrefetchScalarGridSpec(
            num_scalar_prefetch=0,
            grid=(nb, nq),
            in_specs=[
                pl.BlockSpec((bb, C, tq), lambda b, q: (b, 0, q)),
                pl.BlockSpec((bb, S, tq), lambda b, q: (b, 0, q)),
                pl.BlockSpec((bb, 1, tq), lambda b, q: (b, 0, q)),
                pl.BlockSpec((bb, 1, tq), lambda b, q: (b, 0, q)),
                pl.BlockSpec((C, 1), const_map),
                pl.BlockSpec((C, 1), const_map),
                pl.BlockSpec((C, 1), const_map),
                pl.BlockSpec((S, 1), const_map),
                pl.BlockSpec((S, 1), const_map),
            ],
            out_specs=(
                pl.BlockSpec((bb, C, 1), lambda b, q: (b, 0, 0)),
                pl.BlockSpec((bb, S, 1), lambda b, q: (b, 0, 0)),
                pl.BlockSpec((bb, 1, 1), lambda b, q: (b, 0, 0)),
            )),
        compiler_params=pltpu.CompilerParams(
            dimension_semantics=("parallel", "arbitrary"),
            vmem_limit_bytes=32 * 1024 * 1024),
    )(cls_t, sup_t, tcls, tsup, cbias, cw, clast, sbias, sw)

    return focal_cls[:, :, 0], focal_sup[:, :, 0], card[:, 0, 0]


# ----------------------------------------------------------------------------
# Box L1 + GIoU kernel ([4, Np] layout, Np padded to a multiple of 128)
# ----------------------------------------------------------------------------
def box_loss_pallas(src_boxes, tgt_boxes):
    """src/tgt boxes are [N, 4] in (cx, cy, w, h).  Returns ([1,Np] L1 per box,
    [1,Np] 1-GIoU per box); padded entries (identical dummy boxes) contribute 0."""
    N = src_boxes.shape[0]
    Np = max(128, ((N + 127) // 128) * 128)
    pad_box = jnp.array([0.5, 0.5, 1.0, 1.0], jnp.float32)   # same dummy box for src & tgt

    def _pad_t(b):
        b = b.astype(jnp.float32)
        pad = jnp.broadcast_to(pad_box, (Np - N, 4))
        return jnp.concatenate([b, pad], axis=0).T           # [4, Np] lane-dense

    s_cn = _pad_t(src_boxes)
    t_cn = _pad_t(tgt_boxes)

    def kernel(s_ref, t_ref, l1_ref, giou_ref):
        s = s_ref[...]                                       # [4, Np]
        t = t_ref[...]
        l1_ref[...] = jnp.sum(jnp.abs(s - t), axis=0, keepdims=True)   # [1, Np]

        # cxcywh -> xyxy (each row is a [1, Np] lane-dense vector)
        s_x0 = s[0:1] - 0.5 * s[2:3]; s_x1 = s[0:1] + 0.5 * s[2:3]
        s_y0 = s[1:2] - 0.5 * s[3:4]; s_y1 = s[1:2] + 0.5 * s[3:4]
        t_x0 = t[0:1] - 0.5 * t[2:3]; t_x1 = t[0:1] + 0.5 * t[2:3]
        t_y0 = t[1:2] - 0.5 * t[3:4]; t_y1 = t[1:2] + 0.5 * t[3:4]

        area_s = (s_x1 - s_x0) * (s_y1 - s_y0)
        area_t = (t_x1 - t_x0) * (t_y1 - t_y0)

        iw = jnp.maximum(jnp.minimum(s_x1, t_x1) - jnp.maximum(s_x0, t_x0), 0.0)
        ih = jnp.maximum(jnp.minimum(s_y1, t_y1) - jnp.maximum(s_y0, t_y0), 0.0)
        inter = iw * ih
        union = area_s + area_t - inter
        iou = inter / union               # no eps, matches the torch reference

        cw = jnp.maximum(jnp.maximum(s_x1, t_x1) - jnp.minimum(s_x0, t_x0), 0.0)
        ch = jnp.maximum(jnp.maximum(s_y1, t_y1) - jnp.minimum(s_y0, t_y0), 0.0)
        area_c = cw * ch
        giou = iou - (area_c - union) / area_c
        giou_ref[...] = 1.0 - giou                          # [1, Np]

    return pl.pallas_call(
        kernel,
        out_shape=(jax.ShapeDtypeStruct((1, Np), jnp.float32),
                   jax.ShapeDtypeStruct((1, Np), jnp.float32)),
        in_specs=[pl.BlockSpec(memory_space=pltpu.MemorySpace.VMEM)] * 2,
        out_specs=(pl.BlockSpec(memory_space=pltpu.MemorySpace.VMEM),
                   pl.BlockSpec(memory_space=pltpu.MemorySpace.VMEM)),
    )(s_cn, t_cn)


# ----------------------------------------------------------------------------
# SetCriterion.forward (glue around the kernels)
# ----------------------------------------------------------------------------
def set_criterion_forward(outputs, targets, indices, *, num_classes, num_superclass,
                          invalid_cls_logits, invalid_sup_logits,
                          focal_alpha=0.25, empty_weight=0.1):
    pred_logits = outputs['pred_logits']          # [B, Q, C]
    pred_boxes = outputs['pred_boxes']            # [B, Q, 4]
    pred_super = outputs['pred_super_logits']     # [B, Q, S]
    B, Q, C = pred_logits.shape

    # _get_src_permutation_idx
    batch_idx = jnp.concatenate(
        [jnp.full_like(src, i) for i, (src, _) in enumerate(indices)])
    src_idx = jnp.concatenate([src for src, _ in indices])

    tgt_labels = jnp.concatenate([t['labels'][J] for t, (_, J) in zip(targets, indices)])
    tgt_super = jnp.concatenate([t['superclasses'][J] for t, (_, J) in zip(targets, indices)])
    tgt_boxes = jnp.concatenate([t['boxes'][J] for t, (_, J) in zip(targets, indices)], axis=0)

    # num_boxes (no torch.distributed all_reduce; world_size == 1)
    num_boxes = float(max(sum(int(t['labels'].shape[0]) for t in targets), 1))

    # Dense [B, Q] int32 target maps (tiny scatter) -- one-hot built in-kernel.
    target_classes = jnp.full((B, Q), num_classes - 1, jnp.int32)
    target_classes = target_classes.at[batch_idx, src_idx].set(tgt_labels.astype(jnp.int32))
    target_sup = jnp.full((B, Q), num_superclass - 1, jnp.int32)
    target_sup = target_sup.at[batch_idx, src_idx].set(tgt_super.astype(jnp.int32))

    focal_cls, focal_sup, card_pred = fused_cls_losses_pallas(
        pred_logits, pred_super, target_classes, target_sup,
        invalid_cls=invalid_cls_logits, invalid_sup=invalid_sup_logits,
        alpha=focal_alpha, empty_weight=empty_weight)

    losses = {}

    # ---------------- loss_labels / loss_superclass ----------------
    # focal_* hold the sum over queries; reference: loss.mean(1).sum()/num_boxes * Q
    losses['loss_ce'] = (jnp.sum(focal_cls) / Q) / num_boxes * Q
    losses['loss_sup_ce'] = (jnp.sum(focal_sup) / Q) / num_boxes * Q

    # class_error: mask invalid logits only on the tiny gathered [N, C] slice.
    matched_logits = pred_logits[batch_idx, src_idx]                          # [N, C]
    if len(invalid_cls_logits):
        matched_logits = matched_logits.at[
            :, jnp.asarray(list(invalid_cls_logits), jnp.int32)].set(-1e11)
    pred_cls = jnp.argmax(matched_logits, axis=-1)
    acc = 100.0 * jnp.mean((pred_cls == tgt_labels).astype(jnp.float32))
    losses['class_error'] = 100.0 - acc

    # ---------------- loss_cardinality ----------------
    tgt_lengths = jnp.array([t['labels'].shape[0] for t in targets], jnp.float32)
    losses['cardinality_error'] = jnp.mean(jnp.abs(card_pred - tgt_lengths))

    # ---------------- loss_boxes ----------------
    src_boxes = pred_boxes[batch_idx, src_idx]                                # [N, 4]
    l1_per_box, one_minus_giou = box_loss_pallas(src_boxes, tgt_boxes)        # [1, Np]
    losses['loss_bbox'] = jnp.sum(l1_per_box) / num_boxes
    losses['loss_giou'] = jnp.sum(one_minus_giou) / num_boxes

    # 'aux_outputs' / 'enc_outputs' keys are absent in this synthetic setup, so
    # (as in the reference) those branches are not executed.
    # TODO(synk): compute_dn_loss (denoising losses) not provided in the reference
    # source; omitted.
    return losses


# ----------------------------------------------------------------------------
if __name__ == "__main__":
    key = jax.random.PRNGKey(0)
    B, Q, C, S = 2, 16, 8, 4   # batch, queries, num_classes, num_superclass
    k1, k2, k3 = jax.random.split(key, 3)

    outputs = {
        'pred_logits': jax.random.normal(k1, (B, Q, C), jnp.float32),
        'pred_boxes': jax.nn.sigmoid(jax.random.normal(k2, (B, Q, 4), jnp.float32)),
        'pred_super_logits': jax.random.normal(k3, (B, Q, S), jnp.float32),
    }

    targets = [
        {'labels': jnp.array([1, 3, 5], jnp.int32),
         'superclasses': jnp.array([0, 1, 2], jnp.int32),
         'boxes': jnp.array([[0.50, 0.50, 0.20, 0.20],
                             [0.30, 0.70, 0.10, 0.30],
                             [0.60, 0.40, 0.25, 0.15]], jnp.float32)},
        {'labels': jnp.array([2, 4], jnp.int32),
         'superclasses': jnp.array([1, 0], jnp.int32),
         'boxes': jnp.array([[0.40, 0.60, 0.30, 0.20],
                             [0.70, 0.30, 0.15, 0.25]], jnp.float32)},
    ]

    # TODO(synk): Hungarian matcher (scipy.optimize.linear_sum_assignment) has no
    # clean Pallas equivalent; indices are a fixed deterministic matching here.
    indices = [
        (jnp.array([0, 3, 7], jnp.int32), jnp.array([0, 1, 2], jnp.int32)),
        (jnp.array([2, 5], jnp.int32), jnp.array([1, 0], jnp.int32)),
    ]

    losses = set_criterion_forward(
        outputs, targets, indices,
        num_classes=C, num_superclass=S,
        invalid_cls_logits=[6], invalid_sup_logits=[],
        focal_alpha=0.25, empty_weight=0.1)

    losses = {k: jax.block_until_ready(v) for k, v in losses.items()}
    print("KERNEL_OK")
</pallas_src>

<mosaic_0001>
module attributes {stable_mosaic.version = 11 : i64} {
  func.func @_fused_cls_kernel(%arg0: i32, %arg1: i32, %arg2: memref<2x8x16xf32, #tpu.memory_space<vmem>>, %arg3: memref<2x4x16xf32, #tpu.memory_space<vmem>>, %arg4: memref<2x1x16xi32, #tpu.memory_space<vmem>>, %arg5: memref<2x1x16xi32, #tpu.memory_space<vmem>>, %arg6: memref<8x1xf32, #tpu.memory_space<vmem>>, %arg7: memref<8x1xf32, #tpu.memory_space<vmem>>, %arg8: memref<8x1xf32, #tpu.memory_space<vmem>>, %arg9: memref<4x1xf32, #tpu.memory_space<vmem>>, %arg10: memref<4x1xf32, #tpu.memory_space<vmem>>, %arg11: memref<2x8x1xf32, #tpu.memory_space<vmem>>, %arg12: memref<2x4x1xf32, #tpu.memory_space<vmem>>, %arg13: memref<2x1x1xf32, #tpu.memory_space<vmem>>) attributes {dimension_semantics = [#tpu.dimension_semantics<parallel>, #tpu.dimension_semantics<arbitrary>], iteration_bounds = array<i64: 1, 1>, scalar_prefetch = 0 : i64, scratch_operands = 0 : i64, tpu.core_type = #tpu.core_type<tc>, window_params = [{transform_indices = @transform_0, window_bounds = array<i64: 2, 8, 16>}, {transform_indices = @transform_1, window_bounds = array<i64: 2, 4, 16>}, {transform_indices = @transform_2, window_bounds = array<i64: 2, 1, 16>}, {transform_indices = @transform_3, window_bounds = array<i64: 2, 1, 16>}, {pipeline_mode = #tpu.pipeline_mode<synchronous>, transform_indices = @transform_4, window_bounds = array<i64: 8, 1>}, {pipeline_mode = #tpu.pipeline_mode<synchronous>, transform_indices = @transform_5, window_bounds = array<i64: 8, 1>}, {pipeline_mode = #tpu.pipeline_mode<synchronous>, transform_indices = @transform_6, window_bounds = array<i64: 8, 1>}, {pipeline_mode = #tpu.pipeline_mode<synchronous>, transform_indices = @transform_7, window_bounds = array<i64: 4, 1>}, {pipeline_mode = #tpu.pipeline_mode<synchronous>, transform_indices = @transform_8, window_bounds = array<i64: 4, 1>}, {transform_indices = @transform_9, window_bounds = array<i64: 2, 8, 1>}, {transform_indices = @transform_10, window_bounds = array<i64: 2, 4, 1>}, {transform_indices = @transform_11, window_bounds = array<i64: 2, 1, 1>}]} {
    %c0_i32 = arith.constant 0 : i32
    %0 = arith.cmpi eq, %arg1, %c0_i32 : i32
    %1 = arith.extui %0 : i1 to i32
    %c0_i32_0 = arith.constant 0 : i32
    %2 = arith.cmpi ne, %1, %c0_i32_0 : i32
    scf.if %2 {
      %cst_71 = arith.constant 0.000000e+00 : f32
      %139 = vector.broadcast %cst_71 : f32 to vector<2x8x1xf32>
      %c0_72 = arith.constant 0 : index
      %c0_73 = arith.constant 0 : index
      %c0_74 = arith.constant 0 : index
      %140 = vector.load %arg11[%c0_72, %c0_73, %c0_74] : memref<2x8x1xf32, #tpu.memory_space<vmem>>, vector<2x8x1xf32>
      tpu.vector_store %arg11[%c0_72, %c0_73, %c0_74], %139 {strides = array<i32>} : memref<2x8x1xf32, #tpu.memory_space<vmem>>, vector<2x8x1xf32>,
      %cst_75 = arith.constant 0.000000e+00 : f32
      %141 = vector.broadcast %cst_75 : f32 to vector<2x4x1xf32>
      %c0_76 = arith.constant 0 : index
      %c0_77 = arith.constant 0 : index
      %c0_78 = arith.constant 0 : index
      %142 = vector.load %arg12[%c0_76, %c0_77, %c0_78] : memref<2x4x1xf32, #tpu.memory_space<vmem>>, vector<2x4x1xf32>
      tpu.vector_store %arg12[%c0_76, %c0_77, %c0_78], %141 {strides = array<i32>} : memref<2x4x1xf32, #tpu.memory_space<vmem>>, vector<2x4x1xf32>,
      %cst_79 = arith.constant 0.000000e+00 : f32
      %143 = vector.broadcast %cst_79 : f32 to vector<2x1x1xf32>
      %c0_80 = arith.constant 0 : index
      %c0_81 = arith.constant 0 : index
      %c0_82 = arith.constant 0 : index
      %144 = vector.load %arg13[%c0_80, %c0_81, %c0_82] : memref<2x1x1xf32, #tpu.memory_space<vmem>>, vector<2x1x1xf32>
      tpu.vector_store %arg13[%c0_80, %c0_81, %c0_82], %143 {strides = array<i32>} : memref<2x1x1xf32, #tpu.memory_space<vmem>>, vector<2x1x1xf32>,
    } else {
    }
    %c0 = arith.constant 0 : index
    %c0_1 = arith.constant 0 : index
    %c0_2 = arith.constant 0 : index
    %3 = vector.load %arg2[%c0, %c0_1, %c0_2] : memref<2x8x16xf32, #tpu.memory_space<vmem>>, vector<2x8x16xf32>
    %c0_3 = arith.constant 0 : index
    %c0_4 = arith.constant 0 : index
    %c0_5 = arith.constant 0 : index
    %4 = vector.load %arg3[%c0_3, %c0_4, %c0_5] : memref<2x4x16xf32, #tpu.memory_space<vmem>>, vector<2x4x16xf32>
    %c0_6 = arith.constant 0 : index
    %c0_7 = arith.constant 0 : index
    %c0_8 = arith.constant 0 : index
    %5 = vector.load %arg4[%c0_6, %c0_7, %c0_8] : memref<2x1x16xi32, #tpu.memory_space<vmem>>, vector<2x1x16xi32>
    %c0_9 = arith.constant 0 : index
    %c0_10 = arith.constant 0 : index
    %c0_11 = arith.constant 0 : index
    %6 = vector.load %arg5[%c0_9, %c0_10, %c0_11] : memref<2x1x16xi32, #tpu.memory_space<vmem>>, vector<2x1x16xi32>
    %c0_12 = arith.constant 0 : index
    %c7 = arith.constant 7 : index
    %c0_13 = arith.constant 0 : index
    %7 = vector.load %arg2[%c0_12, %c7, %c0_13] : memref<2x8x16xf32, #tpu.memory_space<vmem>>, vector<2x1x16xf32>
    %c0_14 = arith.constant 0 : index
    %c0_15 = arith.constant 0 : index
    %8 = vector.load %arg8[%c0_14, %c0_15] : memref<8x1xf32, #tpu.memory_space<vmem>>, vector<8x1xf32>
    %cst = arith.constant 0.000000e+00 : f32
    %9 = vector.broadcast %cst : f32 to vector<8x1xf32>
    %10 = arith.cmpf ogt, %8, %9 : vector<8x1xf32>
    %cst_16 = arith.constant 0xFF800000 : f32
    %11 = vector.shape_cast %10 : vector<8x1xi1> to vector<1x8x1xi1>
    %12 = vector.broadcast %11 : vector<1x8x1xi1> to vector<2x8x16xi1>
    %13 = vector.broadcast %cst_16 : f32 to vector<2x8x16xf32>
    %14 = arith.select %12, %13, %3 : vector<2x8x16xi1>, vector<2x8x16xf32>
    %cst_17 = arith.constant dense<0xFF800000> : vector<2x16xf32>
    %15 = vector.multi_reduction <maximumf>, %14, %cst_17 [1] : vector<2x8x16xf32> to vector<2x16xf32>
    %16 = vector.shape_cast %15 : vector<2x16xf32> to vector<2x1x16xf32>
    %c0_18 = arith.constant 0 : index
    %c0_19 = arith.constant 0 : index
    %c0_20 = arith.constant 0 : index
    %17 = vector.load %arg13[%c0_18, %c0_19, %c0_20] : memref<2x1x1xf32, #tpu.memory_space<vmem>>, vector<2x1x1xf32>
    %18 = arith.cmpf oge, %16, %7 : vector<2x1x16xf32>
    %19 = arith.extui %18 : vector<2x1x16xi1> to vector<2x1x16xi32>
    %20 = arith.sitofp %19 : vector<2x1x16xi32> to vector<2x1x16xf32>
    %cst_21 = arith.constant dense<0.000000e+00> : vector<2x1xf32>
    %21 = vector.multi_reduction <add>, %20, %cst_21 [2] : vector<2x1x16xf32> to vector<2x1xf32>
    %22 = vector.shape_cast %21 : vector<2x1xf32> to vector<2x1x1xf32>
    %23 = arith.addf %17, %22 : vector<2x1x1xf32>
    %c0_22 = arith.constant 0 : index
    %c0_23 = arith.constant 0 : index
    %c0_24 = arith.constant 0 : index
    %24 = vector.load %arg13[%c0_22, %c0_23, %c0_24] : memref<2x1x1xf32, #tpu.memory_space<vmem>>, vector<2x1x1xf32>
    tpu.vector_store %arg13[%c0_22, %c0_23, %c0_24], %23 {strides = array<i32>} : memref<2x1x1xf32, #tpu.memory_space<vmem>>, vector<2x1x1xf32>,
    %c0_25 = arith.constant 0 : index
    %c0_26 = arith.constant 0 : index
    %c0_27 = arith.constant 0 : index
    %25 = vector.load %arg11[%c0_25, %c0_26, %c0_27] : memref<2x8x1xf32, #tpu.memory_space<vmem>>, vector<2x8x1xf32>
    %c0_28 = arith.constant 0 : index
    %c0_29 = arith.constant 0 : index
    %26 = vector.load %arg6[%c0_28, %c0_29] : memref<8x1xf32, #tpu.memory_space<vmem>>, vector<8x1xf32>
    %c0_30 = arith.constant 0 : index
    %c0_31 = arith.constant 0 : index
    %27 = vector.load %arg7[%c0_30, %c0_31] : memref<8x1xf32, #tpu.memory_space<vmem>>, vector<8x1xf32>
    %28 = vector.shape_cast %26 : vector<8x1xf32> to vector<1x8x1xf32>
    %29 = vector.broadcast %28 : vector<1x8x1xf32> to vector<2x8x16xf32>
    %30 = arith.addf %3, %29 : vector<2x8x16xf32>
    %31 = tpu.iota {dimensions = array<i32: 1>} : vector<2x8x16xi32>
    %32 = vector.broadcast %5 : vector<2x1x16xi32> to vector<2x8x16xi32>
    %33 = arith.cmpi eq, %31, %32 : vector<2x8x16xi32>
    %34 = arith.extui %33 : vector<2x8x16xi1> to vector<2x8x16xi32>
    %35 = arith.sitofp %34 : vector<2x8x16xi32> to vector<2x8x16xf32>
    %36 = math.absf %30 : vector<2x8x16xf32>
    %cst_32 = arith.constant 0.000000e+00 : f32
    %37 = vector.broadcast %cst_32 : f32 to vector<2x8x16xf32>
    %38 = arith.subf %37, %36 : vector<2x8x16xf32>
    %39 = math.exp %38 : vector<2x8x16xf32>
    %cst_33 = arith.constant 1.000000e+00 : f32
    %40 = vector.broadcast %cst_33 : f32 to vector<2x8x16xf32>
    %41 = arith.addf %40, %39 : vector<2x8x16xf32>
    %cst_34 = arith.constant 1.000000e+00 : f32
    %42 = vector.broadcast %cst_34 : f32 to vector<2x8x16xf32>
    %43 = arith.divf %42, %41 : vector<2x8x16xf32>
    %cst_35 = arith.constant 0.000000e+00 : f32
    %44 = vector.broadcast %cst_35 : f32 to vector<2x8x16xf32>
    %45 = arith.cmpf oge, %30, %44 : vector<2x8x16xf32>
    %46 = arith.mulf %39, %43 : vector<2x8x16xf32>
    %47 = arith.select %45, %43, %46 : vector<2x8x16xi1>, vector<2x8x16xf32>
    %cst_36 = arith.constant 0.000000e+00 : f32
    %48 = vector.broadcast %cst_36 : f32 to vector<2x8x16xf32>
    %49 = arith.maximumf %30, %48 : vector<2x8x16xf32>
    %50 = arith.mulf %30, %35 : vector<2x8x16xf32>
    %51 = arith.subf %49, %50 : vector<2x8x16xf32>
    %cst_37 = arith.constant 1.000000e+00 : f32
    %52 = vector.broadcast %cst_37 : f32 to vector<2x8x16xf32>
    %53 = arith.addf %52, %39 : vector<2x8x16xf32>
    %54 = math.log %53 : vector<2x8x16xf32>
    %55 = arith.addf %51, %54 : vector<2x8x16xf32>
    %56 = vector.shape_cast %27 : vector<8x1xf32> to vector<1x8x1xf32>
    %57 = vector.broadcast %56 : vector<1x8x1xf32> to vector<2x8x16xf32>
    %58 = arith.mulf %55, %57 : vector<2x8x16xf32>
    %59 = arith.mulf %47, %35 : vector<2x8x16xf32>
    %cst_38 = arith.constant 1.000000e+00 : f32
    %60 = vector.broadcast %cst_38 : f32 to vector<2x8x16xf32>
    %61 = arith.subf %60, %47 : vector<2x8x16xf32>
    %cst_39 = arith.constant 1.000000e+00 : f32
    %62 = vector.broadcast %cst_39 : f32 to vector<2x8x16xf32>
    %63 = arith.subf %62, %35 : vector<2x8x16xf32>
    %64 = arith.mulf %61, %63 : vector<2x8x16xf32>
    %65 = arith.addf %59, %64 : vector<2x8x16xf32>
    %cst_40 = arith.constant 1.000000e+00 : f32
    %66 = vector.broadcast %cst_40 : f32 to vector<2x8x16xf32>
    %67 = arith.subf %66, %65 : vector<2x8x16xf32>
    %68 = arith.mulf %67, %67 : vector<2x8x16xf32>
    %69 = arith.mulf %58, %68 : vector<2x8x16xf32>
    %cst_41 = arith.constant 2.500000e-01 : f32
    %70 = vector.broadcast %cst_41 : f32 to vector<2x8x16xf32>
    %71 = arith.mulf %70, %35 : vector<2x8x16xf32>
    %cst_42 = arith.constant 1.000000e+00 : f32
    %72 = vector.broadcast %cst_42 : f32 to vector<2x8x16xf32>
    %73 = arith.subf %72, %35 : vector<2x8x16xf32>
    %cst_43 = arith.constant 7.500000e-01 : f32
    %74 = vector.broadcast %cst_43 : f32 to vector<2x8x16xf32>
    %75 = arith.mulf %74, %73 : vector<2x8x16xf32>
    %76 = arith.addf %71, %75 : vector<2x8x16xf32>
    %77 = arith.mulf %76, %69 : vector<2x8x16xf32>
    %cst_44 = arith.constant dense<0.000000e+00> : vector<2x8xf32>
    %78 = vector.multi_reduction <add>, %77, %cst_44 [2] : vector<2x8x16xf32> to vector<2x8xf32>
    %79 = vector.shape_cast %78 : vector<2x8xf32> to vector<2x8x1xf32>
    %80 = arith.addf %25, %79 : vector<2x8x1xf32>
    %c0_45 = arith.constant 0 : index
    %c0_46 = arith.constant 0 : index
    %c0_47 = arith.constant 0 : index
    %81 = vector.load %arg11[%c0_45, %c0_46, %c0_47] : memref<2x8x1xf32, #tpu.memory_space<vmem>>, vector<2x8x1xf32>
    tpu.vector_store %arg11[%c0_45, %c0_46, %c0_47], %80 {strides = array<i32>} : memref<2x8x1xf32, #tpu.memory_space<vmem>>, vector<2x8x1xf32>,
    %c0_48 = arith.constant 0 : index
    %c0_49 = arith.constant 0 : index
    %c0_50 = arith.constant 0 : index
    %82 = vector.load %arg12[%c0_48, %c0_49, %c0_50] : memref<2x4x1xf32, #tpu.memory_space<vmem>>, vector<2x4x1xf32>
    %c0_51 = arith.constant 0 : index
    %c0_52 = arith.constant 0 : index
    %83 = vector.load %arg9[%c0_51, %c0_52] : memref<4x1xf32, #tpu.memory_space<vmem>>, vector<4x1xf32>
    %c0_53 = arith.constant 0 : index
    %c0_54 = arith.constant 0 : index
    %84 = vector.load %arg10[%c0_53, %c0_54] : memref<4x1xf32, #tpu.memory_space<vmem>>, vector<4x1xf32>
    %85 = vector.shape_cast %83 : vector<4x1xf32> to vector<1x4x1xf32>
    %86 = vector.broadcast %85 : vector<1x4x1xf32> to vector<2x4x16xf32>
    %87 = arith.addf %4, %86 : vector<2x4x16xf32>
    %88 = tpu.iota {dimensions = array<i32: 1>} : vector<2x4x16xi32>
    %89 = vector.broadcast %6 : vector<2x1x16xi32> to vector<2x4x16xi32>
    %90 = arith.cmpi eq, %88, %89 : vector<2x4x16xi32>
    %91 = arith.extui %90 : vector<2x4x16xi1> to vector<2x4x16xi32>
    %92 = arith.sitofp %91 : vector<2x4x16xi32> to vector<2x4x16xf32>
    %93 = math.absf %87 : vector<2x4x16xf32>
    %cst_55 = arith.constant 0.000000e+00 : f32
    %94 = vector.broadcast %cst_55 : f32 to vector<2x4x16xf32>
    %95 = arith.subf %94, %93 : vector<2x4x16xf32>
    %96 = math.exp %95 : vector<2x4x16xf32>
    %cst_56 = arith.constant 1.000000e+00 : f32
    %97 = vector.broadcast %cst_56 : f32 to vector<2x4x16xf32>
    %98 = arith.addf %97, %96 : vector<2x4x16xf32>
    %cst_57 = arith.constant 1.000000e+00 : f32
    %99 = vector.broadcast %cst_57 : f32 to vector<2x4x16xf32>
    %100 = arith.divf %99, %98 : vector<2x4x16xf32>
    %cst_58 = arith.constant 0.000000e+00 : f32
    %101 = vector.broadcast %cst_58 : f32 to vector<2x4x16xf32>
    %102 = arith.cmpf oge, %87, %101 : vector<2x4x16xf32>
    %103 = arith.mulf %96, %100 : vector<2x4x16xf32>
    %104 = arith.select %102, %100, %103 : vector<2x4x16xi1>, vector<2x4x16xf32>
    %cst_59 = arith.constant 0.000000e+00 : f32
    %105 = vector.broadcast %cst_59 : f32 to vector<2x4x16xf32>
    %106 = arith.maximumf %87, %105 : vector<2x4x16xf32>
    %107 = arith.mulf %87, %92 : vector<2x4x16xf32>
    %108 = arith.subf %106, %107 : vector<2x4x16xf32>
    %cst_60 = arith.constant 1.000000e+00 : f32
    %109 = vector.broadcast %cst_60 : f32 to vector<2x4x16xf32>
    %110 = arith.addf %109, %96 : vector<2x4x16xf32>
    %111 = math.log %110 : vector<2x4x16xf32>
    %112 = arith.addf %108, %111 : vector<2x4x16xf32>
    %113 = vector.shape_cast %84 : vector<4x1xf32> to vector<1x4x1xf32>
    %114 = vector.broadcast %113 : vector<1x4x1xf32> to vector<2x4x16xf32>
    %115 = arith.mulf %112, %114 : vector<2x4x16xf32>
    %116 = arith.mulf %104, %92 : vector<2x4x16xf32>
    %cst_61 = arith.constant 1.000000e+00 : f32
    %117 = vector.broadcast %cst_61 : f32 to vector<2x4x16xf32>
    %118 = arith.subf %117, %104 : vector<2x4x16xf32>
    %cst_62 = arith.constant 1.000000e+00 : f32
    %119 = vector.broadcast %cst_62 : f32 to vector<2x4x16xf32>
    %120 = arith.subf %119, %92 : vector<2x4x16xf32>
    %121 = arith.mulf %118, %120 : vector<2x4x16xf32>
    %122 = arith.addf %116, %121 : vector<2x4x16xf32>
    %cst_63 = arith.constant 1.000000e+00 : f32
    %123 = vector.broadcast %cst_63 : f32 to vector<2x4x16xf32>
    %124 = arith.subf %123, %122 : vector<2x4x16xf32>
    %125 = arith.mulf %124, %124 : vector<2x4x16xf32>
    %126 = arith.mulf %115, %125 : vector<2x4x16xf32>
    %cst_64 = arith.constant 2.500000e-01 : f32
    %127 = vector.broadcast %cst_64 : f32 to vector<2x4x16xf32>
    %128 = arith.mulf %127, %92 : vector<2x4x16xf32>
    %cst_65 = arith.constant 1.000000e+00 : f32
    %129 = vector.broadcast %cst_65 : f32 to vector<2x4x16xf32>
    %130 = arith.subf %129, %92 : vector<2x4x16xf32>
    %cst_66 = arith.constant 7.500000e-01 : f32
    %131 = vector.broadcast %cst_66 : f32 to vector<2x4x16xf32>
    %132 = arith.mulf %131, %130 : vector<2x4x16xf32>
    %133 = arith.addf %128, %132 : vector<2x4x16xf32>
    %134 = arith.mulf %133, %126 : vector<2x4x16xf32>
    %cst_67 = arith.constant dense<0.000000e+00> : vector<2x4xf32>
    %135 = vector.multi_reduction <add>, %134, %cst_67 [2] : vector<2x4x16xf32> to vector<2x4xf32>
    %136 = vector.shape_cast %135 : vector<2x4xf32> to vector<2x4x1xf32>
    %137 = arith.addf %82, %136 : vector<2x4x1xf32>
    %c0_68 = arith.constant 0 : index
    %c0_69 = arith.constant 0 : index
    %c0_70 = arith.constant 0 : index
    %138 = vector.load %arg12[%c0_68, %c0_69, %c0_70] : memref<2x4x1xf32, #tpu.memory_space<vmem>>, vector<2x4x1xf32>
    tpu.vector_store %arg12[%c0_68, %c0_69, %c0_70], %137 {strides = array<i32>} : memref<2x4x1xf32, #tpu.memory_space<vmem>>, vector<2x4x1xf32>,
    return
  }
  func.func @transform_0(%arg0: i32, %arg1: i32) -> (i32, i32, i32) {
    %c0_i32 = arith.constant 0 : i32
    %c0_i32_0 = arith.constant 0 : i32
    return %arg0, %c0_i32, %arg1 : i32, i32, i32
  }
  func.func @transform_1(%arg0: i32, %arg1: i32) -> (i32, i32, i32) {
    %c0_i32 = arith.constant 0 : i32
    %c0_i32_0 = arith.constant 0 : i32
    return %arg0, %c0_i32, %arg1 : i32, i32, i32
  }
  func.func @transform_2(%arg0: i32, %arg1: i32) -> (i32, i32, i32) {
    %c0_i32 = arith.constant 0 : i32
    %c0_i32_0 = arith.constant 0 : i32
    return %arg0, %c0_i32, %arg1 : i32, i32, i32
  }
  func.func @transform_3(%arg0: i32, %arg1: i32) -> (i32, i32, i32) {
    %c0_i32 = arith.constant 0 : i32
    %c0_i32_0 = arith.constant 0 : i32
    return %arg0, %c0_i32, %arg1 : i32, i32, i32
  }
  func.func @transform_4(%arg0: i32, %arg1: i32) -> (i32, i32) {
    %c0_i32 = arith.constant 0 : i32
    %c0_i32_0 = arith.constant 0 : i32
    %c0_i32_1 = arith.constant 0 : i32
    return %c0_i32, %c0_i32_0 : i32, i32
  }
  func.func @transform_5(%arg0: i32, %arg1: i32) -> (i32, i32) {
    %c0_i32 = arith.constant 0 : i32
    %c0_i32_0 = arith.constant 0 : i32
    %c0_i32_1 = arith.constant 0 : i32
    return %c0_i32, %c0_i32_0 : i32, i32
  }
  func.func @transform_6(%arg0: i32, %arg1: i32) -> (i32, i32) {
    %c0_i32 = arith.constant 0 : i32
    %c0_i32_0 = arith.constant 0 : i32
    %c0_i32_1 = arith.constant 0 : i32
    return %c0_i32, %c0_i32_0 : i32, i32
  }
  func.func @transform_7(%arg0: i32, %arg1: i32) -> (i32, i32) {
    %c0_i32 = arith.constant 0 : i32
    %c0_i32_0 = arith.constant 0 : i32
    %c0_i32_1 = arith.constant 0 : i32
    return %c0_i32, %c0_i32_0 : i32, i32
  }
  func.func @transform_8(%arg0: i32, %arg1: i32) -> (i32, i32) {
    %c0_i32 = arith.constant 0 : i32
    %c0_i32_0 = arith.constant 0 : i32
    %c0_i32_1 = arith.constant 0 : i32
    return %c0_i32, %c0_i32_0 : i32, i32
  }
  func.func @transform_9(%arg0: i32, %arg1: i32) -> (i32, i32, i32) {
    %c0_i32 = arith.constant 0 : i32
    %c0_i32_0 = arith.constant 0 : i32
    %c0_i32_1 = arith.constant 0 : i32
    return %arg0, %c0_i32, %c0_i32_0 : i32, i32, i32
  }
  func.func @transform_10(%arg0: i32, %arg1: i32) -> (i32, i32, i32) {
    %c0_i32 = arith.constant 0 : i32
    %c0_i32_0 = arith.constant 0 : i32
    %c0_i32_1 = arith.constant 0 : i32
    return %arg0, %c0_i32, %c0_i32_0 : i32, i32, i32
  }
  func.func @transform_11(%arg0: i32, %arg1: i32) -> (i32, i32, i32) {
    %c0_i32 = arith.constant 0 : i32
    %c0_i32_0 = arith.constant 0 : i32
    %c0_i32_1 = arith.constant 0 : i32
    return %arg0, %c0_i32, %c0_i32_0 : i32, i32, i32
  }
}

</mosaic_0001>

<llo_original>
// kernel: tpu_custom_call.1
$region0: #{tpu_custom_call.1}
  #allocation0 [shape = 'u32[]', space=smem, size = 0x4, offset = 0x4, fixed_abs, tag = 'smem constant byte address 0x4 - core index']
  #allocation1 [shape = 'u32[72,128]{1,0:T(1,128)}', space=vmem, size = 0x9000, scoped, tag = 'internal scratch']
  %s0 = inlined_call_operand.vmem [shape: f32[2,8,16], index: 0, kind: input, shape index: {}]
  %s1 = inlined_call_operand.vmem [shape: f32[2,4,16], index: 1, kind: input, shape index: {}]
  %s2 = inlined_call_operand.vmem [shape: s32[2,1,16], index: 2, kind: input, shape index: {}]
  %s3 = inlined_call_operand.vmem [shape: s32[2,1,16], index: 3, kind: input, shape index: {}]
  %s4 = inlined_call_operand.vmem [shape: f32[8,1], index: 4, kind: input, shape index: {}]
  %s5 = inlined_call_operand.vmem [shape: f32[8,1], index: 5, kind: input, shape index: {}]
  %s6 = inlined_call_operand.vmem [shape: f32[8,1], index: 6, kind: input, shape index: {}]
  %s7 = inlined_call_operand.vmem [shape: f32[4,1], index: 7, kind: input, shape index: {}]
  %s8 = inlined_call_operand.vmem [shape: f32[4,1], index: 8, kind: input, shape index: {}]
  %s9 = inlined_call_operand.vmem [shape: f32[2,8,1], index: 9, kind: output, shape index: {0}]
  %s10 = inlined_call_operand.vmem [shape: f32[2,4,1], index: 10, kind: output, shape index: {1}]
  %s11 = inlined_call_operand.vmem [shape: f32[2,1,1], index: 11, kind: output, shape index: {2}]
  %12 = xla_tuple %s9, %s10, %s11
  %s13 = sld [smem:[#allocation0]]
  $region66: #{tpu_custom_call.1} parent=0
    _
  %s15 = ssub.s32 1, %s13
  %s16 = scalar_select 0, %s15, %s13
  // Predicated region
  $region2: #{tpu_custom_call.1} parent=0 // pred_check
    _
  $region3: #{tpu_custom_call.1} parent=0 // pred_check_branch
    %18 = sbr.rel (0) target = $region5
  $region4: #{tpu_custom_call.1} parent=0 // pred_region
    _
  $region5: #{tpu_custom_call.1} parent=0 // pred_fallthru
    _
  // Predicated region
  $region6: #{tpu_custom_call.1} parent=0 // pred_check
    _
  $region7: #{tpu_custom_call.1} parent=0 // pred_check_branch
    %20 = sbr.rel (0) target = $region9
  $region8: #{tpu_custom_call.1} parent=0 // pred_region
    _
  $region9: #{tpu_custom_call.1} parent=0 // pred_fallthru
    _
  // Predicated region
  $region10: #{tpu_custom_call.1} parent=0 // pred_check
    _
  $region11: #{tpu_custom_call.1} parent=0 // pred_check_branch
    %22 = sbr.rel (0) target = $region13
  $region12: #{tpu_custom_call.1} parent=0 // pred_region
    _
  $region13: #{tpu_custom_call.1} parent=0 // pred_fallthru
    _
  // Predicated region
  $region14: #{tpu_custom_call.1} parent=0 // pred_check
    _
  $region15: #{tpu_custom_call.1} parent=0 // pred_check_branch
    %24 = sbr.rel (0) target = $region17
  $region16: #{tpu_custom_call.1} parent=0 // pred_region
    _
  $region17: #{tpu_custom_call.1} parent=0 // pred_fallthru
    _
  // Predicated region
  $region18: #{tpu_custom_call.1} parent=0 // pred_check
    _
  $region19: #{tpu_custom_call.1} parent=0 // pred_check_branch
    %26 = sbr.rel (0) target = $region21
  $region20: #{tpu_custom_call.1} parent=0 // pred_region
    _
  $region21: #{tpu_custom_call.1} parent=0 // pred_fallthru
    _
  // Predicated region
  $region22: #{tpu_custom_call.1} parent=0 // pred_check
    _
  $region23: #{tpu_custom_call.1} parent=0 // pred_check_branch
    %28 = sbr.rel (0) target = $region25
  $region24: #{tpu_custom_call.1} parent=0 // pred_region
    _
  $region25: #{tpu_custom_call.1} parent=0 // pred_fallthru
    _
  // Predicated region
  $region26: #{tpu_custom_call.1} parent=0 // pred_check
    _
  $region27: #{tpu_custom_call.1} parent=0 // pred_check_branch
    %30 = sbr.rel (0) target = $region29
  $region28: #{tpu_custom_call.1} parent=0 // pred_region
    _
  $region29: #{tpu_custom_call.1} parent=0 // pred_fallthru
    _
  // Predicated region
  $region30: #{tpu_custom_call.1} parent=0 // pred_check
    _
  $region31: #{tpu_custom_call.1} parent=0 // pred_check_branch
    %32 = sbr.rel (0) target = $region33
  $region32: #{tpu_custom_call.1} parent=0 // pred_region
    _
  $region33: #{tpu_custom_call.1} parent=0 // pred_fallthru
    _
  // Predicated region
  $region34: #{tpu_custom_call.1} parent=0 // pred_check
    _
  $region35: #{tpu_custom_call.1} parent=0 // pred_check_branch
    %34 = sbr.rel (0) target = $region37
  $region36: #{tpu_custom_call.1} parent=0 // pred_region
    _
  $region37: #{tpu_custom_call.1} parent=0 // pred_fallthru
    _
  %p35 = scmp.eq.s32.totalorder 0, 0
  // Predicated region
  $region38: #{tpu_custom_call.1} parent=0 // pred_check
    %p36 = pneg %p35
  $region39: #{tpu_custom_call.1} parent=0 // pred_check_branch
    %38 = sbr.rel (%p36) target = $region41
  $region40: #{tpu_custom_call.1} parent=0 // pred_region
    %vm39 = vcmask 7168
    %40 = vst.msk [vmem:[%s9] sm:$0xff] %vm39, 0.0
    %41 = vst.msk [vmem:[%s9 + $0x8] sm:$0xff] %vm39, 0.0
    %vm42 = vcmask 3072
    %43 = vst.msk [vmem:[%s10] sm:$0xf] %vm42, 0.0
    %44 = vst.msk [vmem:[%s10 + $0x4] sm:$0xf] %vm42, 0.0
    %vm45 = vcmask 0
    %46 = vst.msk [vmem:[%s11] sm:$0x1] %vm45, 0.0
    %47 = vst.msk [vmem:[%s11 + $0x1] sm:$0x1] %vm45, 0.0
  $region41: #{tpu_custom_call.1} parent=0 // pred_fallthru
    _
  %v48 = vld [vmem:[%s0] sm:$0xff]
  %v49 = vld [vmem:[%s0 + $0x8] sm:$0xff]
  %v50 = vld [vmem:[%s1] sm:$0xf]
  %v51 = vld [vmem:[%s1 + $0x4] sm:$0xf]
  %v52 = vld [vmem:[%s2] sm:$0x1]
  %v53 = vld [vmem:[%s2 + $0x1] sm:$0x1]
  %v54 = vld [vmem:[%s3] sm:$0x1]
  %v55 = vld [vmem:[%s3 + $0x1] sm:$0x1]
  %v56 = vld [vmem:[%s0 + $0x7] sm:$0x1]
  %v57 = vld [vmem:[%s0 + $0xf] sm:$0x1]
  %v58 = vld [vmem:[%s6] sm:$0xff]
  %vm59 = vcmp.gt.f32.partialorder %v58, 0.0
  %v60 = vsel %vm59, 1, 0
  %61 = vset.pattern.permute.xlu0 0
  %62 = vperm.xlu0 %61, %v60
  %v63 = vpop.permute.xlu0 %62
  %vm64 = vcmp.eq.s32.totalorder %v63, 1
  %v65 = vsel %vm64, -inf, %v48
  %v66 = vsel %vm64, -inf, %v49
  %vm67 = vcmask 130048
  %v68 = vsel %vm67, %v65, -inf
  %v69 = vrot.slane %v68, 4
  %v70 = vmax.f32 %v68, %v69
  %v71 = vrot.slane %v70, 2
  %v72 = vmax.f32 %v70, %v71
  %v73 = vrot.slane %v72, 1
  %v74 = vmax.f32 %v72, %v73
  %v75 = vsel %vm67, %v66, -inf
  %v76 = vrot.slane %v75, 4
  %v77 = vmax.f32 %v75, %v76
  %v78 = vrot.slane %v77, 2
  %v79 = vmax.f32 %v77, %v78
  %v80 = vrot.slane %v79, 1
  %v81 = vmax.f32 %v79, %v80
  %v82 = vld [vmem:[%s11] sm:$0x1]
  %v83 = vld [vmem:[%s11 + $0x1] sm:$0x1]
  %vm84 = vcmp.ge.f32.partialorder %v74, %v56
  %vm85 = vcmp.ge.f32.partialorder %v81, %v57
  %v86 = vsel %vm84, 1, 0
  %v87 = vsel %vm85, 1, 0
  %v88 = vcvt.s32.f32 %v86
  %v89 = vcvt.s32.f32 %v87
  %vm90 = vcmask 122880
  %v91 = vsel %vm90, %v88, 0.0
  %92 = vadd.xlane.f32.xlu0 %v91
  %v93 = vpop.xlane.xlu0 %92
  %v94 = vsel %vm90, %v89, 0.0
  %95 = vadd.xlane.f32.xlu0 %v94
  %v96 = vpop.xlane.xlu0 %95
  %v97 = vadd.f32 %v82, %v93
  %v98 = vadd.f32 %v83, %v96
  %vm99 = vcmask 0
  %100 = vst.msk [vmem:[%s11] sm:$0x1] %vm99, %v97
  %101 = vst.msk [vmem:[%s11 + $0x1] sm:$0x1] %vm99, %v98
  %v102 = vld [vmem:[%s9] sm:$0xff]
  %v103 = vld [vmem:[%s9 + $0x8] sm:$0xff]
  %v104 = vld [vmem:[%s4] sm:$0xff]
  %v105 = vld [vmem:[%s5] sm:$0xff]
  %107 = vset.pattern.permute.xlu0 0
  %108 = vperm.xlu0 %107, %v104
  %v109 = vpop.permute.xlu0 %108
  %v111 = vadd.f32 %v48, %v109
  %v112 = vadd.f32 %v49, %v109
  %v113 = vlaneseq
  %v114 = vshrl.u32 %v113, 7
  %v115 = vperm.slane %v52, 0
  %v116 = vperm.slane %v53, 0
  %vm117 = vcmp.eq.s32.totalorder %v114, %v115
  %vm118 = vcmp.eq.s32.totalorder %v114, %v116
  %v119 = vsel %vm117, 1, 0
  %v120 = vsel %vm118, 1, 0
  %v121 = vcvt.s32.f32 %v119
  %v122 = vcvt.s32.f32 %v120
  %v123 = vand.u32 2147483647, %v111
  %v124 = vand.u32 2147483647, %v112
  %v125 = vsub.f32 0.0, %v123
  %v126 = vsub.f32 0.0, %v124
  %v127 = vmul.f32 %v125, 1.442695
  %v128 = vpow.pop %v127
  %v129 = vmul.f32 %v126, 1.442695
  %v130 = vpow.pop %v129
  %v131 = vadd.f32 %v128, 1.0
  %v132 = vadd.f32 %v130, 1.0
  %v133 = vrcp.pop %v131
  %v134 = vmul.f32 %v131, %v133
  %v135 = vsub.f32 1.0, %v134
  %v136 = vmul.f32 %v133, %v135
  %v137 = vadd.f32 %v133, %v136
  %vm138 = vweird.f32 %v131
  %vm139 = vweird.f32 %v133
  %vm140 = vmor %vm138, %vm139
  %v141 = vsel %vm140, %v133, %v137
  %v142 = vand.u32 2147483647, %v131
  %vm143 = vcmp.eq.f32.partialorder %v142, 8.507059e+37
  %v144 = vand.u32 %v131, 2147483648
  %v145 = vor.u32 1.1754944e-38, %v144
  %v146 = vsel %vm143, %v145, %v141
  %v147 = vmul.f32 1.0, %v146
  %v148 = vrcp.pop %v132
  %v149 = vmul.f32 %v132, %v148
  %v150 = vsub.f32 1.0, %v149
  %v151 = vmul.f32 %v148, %v150
  %v152 = vadd.f32 %v148, %v151
  %vm153 = vweird.f32 %v132
  %vm154 = vweird.f32 %v148
  %vm155 = vmor %vm153, %vm154
  %v156 = vsel %vm155, %v148, %v152
  %v157 = vand.u32 2147483647, %v132
  %vm158 = vcmp.eq.f32.partialorder %v157, 8.507059e+37
  %v159 = vand.u32 %v132, 2147483648
  %v160 = vor.u32 1.1754944e-38, %v159
  %v161 = vsel %vm158, %v160, %v156
  %v162 = vmul.f32 1.0, %v161
  %vm163 = vcmp.ge.f32.partialorder %v111, 0.0
  %vm164 = vcmp.ge.f32.partialorder %v112, 0.0
  %v165 = vmul.f32 %v128, %v147
  %v166 = vmul.f32 %v130, %v162
  %v167 = vsel %vm163, %v147, %v165
  %v168 = vsel %vm164, %v162, %v166
  %v169 = vmax.f32 %v111, 0.0
  %v170 = vmax.f32 %v112, 0.0
  %v171 = vmul.f32 %v111, %v121
  %v172 = vmul.f32 %v112, %v122
  %v173 = vsub.f32 %v169, %v171
  %v174 = vsub.f32 %v170, %v172
  %v175 = vlog2.pop %v131
  %v176 = vmul.f32 %v175, 0.6931472
  %v177 = vlog2.pop %v132
  %v178 = vmul.f32 %v177, 0.6931472
  %v179 = vadd.f32 %v173, %v176
  %v180 = vadd.f32 %v174, %v178
  %182 = vset.pattern.permute.xlu0 0
  %183 = vperm.xlu0 %182, %v105
  %v184 = vpop.permute.xlu0 %183
  %v186 = vmul.f32 %v179, %v184
  %v187 = vmul.f32 %v180, %v184
  %v188 = vmul.f32 %v167, %v121
  %v189 = vmul.f32 %v168, %v122
  %v190 = vsub.f32 1.0, %v167
  %v191 = vsub.f32 1.0, %v168
  %v192 = vsub.f32 1.0, %v121
  %v193 = vsub.f32 1.0, %v122
  %v194 = vmul.f32 %v190, %v192
  %v195 = vmul.f32 %v191, %v193
  %v196 = vadd.f32 %v188, %v194
  %v197 = vadd.f32 %v189, %v195
  %v198 = vsub.f32 1.0, %v196
  %v199 = vsub.f32 1.0, %v197
  %v200 = vmul.f32 %v198, %v198
  %v201 = vmul.f32 %v199, %v199
  %v202 = vmul.f32 %v186, %v200
  %v203 = vmul.f32 %v187, %v201
  %v204 = vmul.f32 %v121, 0.25
  %v205 = vmul.f32 %v122, 0.25
  %v206 = vmul.f32 %v192, 0.75
  %v207 = vmul.f32 %v193, 0.75
  %v208 = vadd.f32 %v204, %v206
  %v209 = vadd.f32 %v205, %v207
  %v210 = vmul.f32 %v208, %v202
  %v211 = vmul.f32 %v209, %v203
  %v212 = vsel %vm67, %v210, 0.0
  %213 = vadd.xlane.f32.xlu0 %v212
  %v214 = vpop.xlane.xlu0 %213
  %v215 = vsel %vm67, %v211, 0.0
  %216 = vadd.xlane.f32.xlu0 %v215
  %v217 = vpop.xlane.xlu0 %216
  %v218 = vadd.f32 %v102, %v214
  %v219 = vadd.f32 %v103, %v217
  %vm220 = vcmask 7168
  %221 = vst.msk [vmem:[%s9] sm:$0xff] %vm220, %v218
  %222 = vst.msk [vmem:[%s9 + $0x8] sm:$0xff] %vm220, %v219
  %v223 = vld [vmem:[%s10] sm:$0xf]
  %v224 = vld [vmem:[%s10 + $0x4] sm:$0xf]
  %v225 = vld [vmem:[%s7] sm:$0xf]
  %v226 = vld [vmem:[%s8] sm:$0xf]
  %228 = vset.pattern.permute.xlu0 0
  %229 = vperm.xlu0 %228, %v225
  %v230 = vpop.permute.xlu0 %229
  %v232 = vadd.f32 %v50, %v230
  %v233 = vadd.f32 %v51, %v230
  %v234 = vperm.slane %v54, 0
  %v235 = vperm.slane %v55, 0
  %vm236 = vcmp.eq.s32.totalorder %v114, %v234
  %vm237 = vcmp.eq.s32.totalorder %v114, %v235
  %v238 = vsel %vm236, 1, 0
  %v239 = vsel %vm237, 1, 0
  %v240 = vcvt.s32.f32 %v238
  %v241 = vcvt.s32.f32 %v239
  %v242 = vand.u32 2147483647, %v232
  %v243 = vand.u32 2147483647, %v233
  %v244 = vsub.f32 0.0, %v242
  %v245 = vsub.f32 0.0, %v243
  %v246 = vmul.f32 %v244, 1.442695
  %v247 = vpow.pop %v246
  %v248 = vmul.f32 %v245, 1.442695
  %v249 = vpow.pop %v248
  %v250 = vadd.f32 %v247, 1.0
  %v251 = vadd.f32 %v249, 1.0
  %v252 = vrcp.pop %v250
  %v253 = vmul.f32 %v250, %v252
  %v254 = vsub.f32 1.0, %v253
  %v255 = vmul.f32 %v252, %v254
  %v256 = vadd.f32 %v252, %v255
  %vm257 = vweird.f32 %v250
  %vm258 = vweird.f32 %v252
  %vm259 = vmor %vm257, %vm258
  %v260 = vsel %vm259, %v252, %v256
  %v261 = vand.u32 2147483647, %v250
  %vm262 = vcmp.eq.f32.partialorder %v261, 8.507059e+37
  %v263 = vand.u32 %v250, 2147483648
  %v264 = vor.u32 1.1754944e-38, %v263
  %v265 = vsel %vm262, %v264, %v260
  %v266 = vmul.f32 1.0, %v265
  %v267 = vrcp.pop %v251
  %v268 = vmul.f32 %v251, %v267
  %v269 = vsub.f32 1.0, %v268
  %v270 = vmul.f32 %v267, %v269
  %v271 = vadd.f32 %v267, %v270
  %vm272 = vweird.f32 %v251
  %vm273 = vweird.f32 %v267
  %vm274 = vmor %vm272, %vm273
  %v275 = vsel %vm274, %v267, %v271
  %v276 = vand.u32 2147483647, %v251
  %vm277 = vcmp.eq.f32.partialorder %v276, 8.507059e+37
  %v278 = vand.u32 %v251, 2147483648
  %v279 = vor.u32 1.1754944e-38, %v278
  %v280 = vsel %vm277, %v279, %v275
  %v281 = vmul.f32 1.0, %v280
  %vm282 = vcmp.ge.f32.partialorder %v232, 0.0
  %vm283 = vcmp.ge.f32.partialorder %v233, 0.0
  %v284 = vmul.f32 %v247, %v266
  %v285 = vmul.f32 %v249, %v281
  %v286 = vsel %vm282, %v266, %v284
  %v287 = vsel %vm283, %v281, %v285
  %v288 = vmax.f32 %v232, 0.0
  %v289 = vmax.f32 %v233, 0.0
  %v290 = vmul.f32 %v232, %v240
  %v291 = vmul.f32 %v233, %v241
  %v292 = vsub.f32 %v288, %v290
  %v293 = vsub.f32 %v289, %v291
  %v294 = vlog2.pop %v250
  %v295 = vmul.f32 %v294, 0.6931472
  %v296 = vlog2.pop %v251
  %v297 = vmul.f32 %v296, 0.6931472
  %v298 = vadd.f32 %v292, %v295
  %v299 = vadd.f32 %v293, %v297
  %301 = vset.pattern.permute.xlu0 0
  %302 = vperm.xlu0 %301, %v226
  %v303 = vpop.permute.xlu0 %302
  %v305 = vmul.f32 %v298, %v303
  %v306 = vmul.f32 %v299, %v303
  %v307 = vmul.f32 %v286, %v240
  %v308 = vmul.f32 %v287, %v241
  %v309 = vsub.f32 1.0, %v286
  %v310 = vsub.f32 1.0, %v287
  %v311 = vsub.f32 1.0, %v240
  %v312 = vsub.f32 1.0, %v241
  %v313 = vmul.f32 %v309, %v311
  %v314 = vmul.f32 %v310, %v312
  %v315 = vadd.f32 %v307, %v313
  %v316 = vadd.f32 %v308, %v314
  %v317 = vsub.f32 1.0, %v315
  %v318 = vsub.f32 1.0, %v316
  %v319 = vmul.f32 %v317, %v317
  %v320 = vmul.f32 %v318, %v318
  %v321 = vmul.f32 %v305, %v319
  %v322 = vmul.f32 %v306, %v320
  %v323 = vmul.f32 %v240, 0.25
  %v324 = vmul.f32 %v241, 0.25
  %v325 = vmul.f32 %v311, 0.75
  %v326 = vmul.f32 %v312, 0.75
  %v327 = vadd.f32 %v323, %v325
  %v328 = vadd.f32 %v324, %v326
  %v329 = vmul.f32 %v327, %v321
  %v330 = vmul.f32 %v328, %v322
  %vm331 = vcmask 125952
  %v332 = vsel %vm331, %v329, 0.0
  %333 = vadd.xlane.f32.xlu0 %v332
  %v334 = vpop.xlane.xlu0 %333
  %v335 = vsel %vm331, %v330, 0.0
  %336 = vadd.xlane.f32.xlu0 %v335
  %v337 = vpop.xlane.xlu0 %336
  %v338 = vadd.f32 %v223, %v334
  %v339 = vadd.f32 %v224, %v337
  %vm340 = vcmask 3072
  %341 = vst.msk [vmem:[%s10] sm:$0xf] %vm340, %v338
  %342 = vst.msk [vmem:[%s10 + $0x4] sm:$0xf] %vm340, %v339
  // Predicated region
  $region42: #{tpu_custom_call.1} parent=0 // pred_check
    _
  $region43: #{tpu_custom_call.1} parent=0 // pred_check_branch
    %344 = sbr.rel (0) target = $region45
  $region44: #{tpu_custom_call.1} parent=0 // pred_region
    _
  $region45: #{tpu_custom_call.1} parent=0 // pred_fallthru
    _
  // Predicated region
  $region46: #{tpu_custom_call.1} parent=0 // pred_check
    _
  $region47: #{tpu_custom_call.1} parent=0 // pred_check_branch
    %346 = sbr.rel (0) target = $region49
  $region48: #{tpu_custom_call.1} parent=0 // pred_region
    _
  $region49: #{tpu_custom_call.1} parent=0 // pred_fallthru
    _
  // Predicated region
  $region50: #{tpu_custom_call.1} parent=0 // pred_check
    _
  $region51: #{tpu_custom_call.1} parent=0 // pred_check_branch
    %348 = sbr.rel (0) target = $region53
  $region52: #{tpu_custom_call.1} parent=0 // pred_region
    _
  $region53: #{tpu_custom_call.1} parent=0 // pred_fallthru
    _
  // Predicated region
  $region54: #{tpu_custom_call.1} parent=0 // pred_check
    _
  $region55: #{tpu_custom_call.1} parent=0 // pred_check_branch
    %350 = sbr.rel (0) target = $region57
  $region56: #{tpu_custom_call.1} parent=0 // pred_region
    _
  $region57: #{tpu_custom_call.1} parent=0 // pred_fallthru
    _
  // Predicated region
  $region58: #{tpu_custom_call.1} parent=0 // pred_check
    _
  $region59: #{tpu_custom_call.1} parent=0 // pred_check_branch
    %352 = sbr.rel (0) target = $region61
  $region60: #{tpu_custom_call.1} parent=0 // pred_region
    _
  $region61: #{tpu_custom_call.1} parent=0 // pred_fallthru
    _
  // Predicated region
  $region62: #{tpu_custom_call.1} parent=0 // pred_check
    _
  $region63: #{tpu_custom_call.1} parent=0 // pred_check_branch
    %354 = sbr.rel (0) target = $region65
  $region64: #{tpu_custom_call.1} parent=0 // pred_region
    _
  $region65: #{tpu_custom_call.1} parent=0 // pred_fallthru
    _

</llo_original>
